<compile_context>
chip_gen: v6e
topology: v6e:2x2x1
jax: 0.10.0
libtpu: 0.0.40
codegen_flags: <defaults>
</compile_context>

<pallas_src>
import numpy as np
import jax
import jax.numpy as jnp
from jax.experimental import pallas as pl
from jax.experimental.pallas import tpu as pltpu


def _attention_kernel(x_ref, wkq_ref, wvt_ref, bv_ref, out_ref):
    bn, l, d = x_ref.shape
    x = x_ref[...]                                    # (bn, L, d), input dtype

    # ---- fused prototype-query score, lane-dense (bn, L) ------------------------------
    w_kq = wkq_ref[...]                               # (1, d) float32, 1/sqrt(d) folded in
    score = jnp.sum(x * w_kq[:, None, :], axis=-1)    # f32 via promotion -> (bn, L)

    # ---- numerically stable softmax over L (lane axis), f32 ---------------------------
    m = jnp.max(score, axis=-1, keepdims=True)        # (bn, 1)
    p = jnp.exp(score - m)
    denom = jnp.sum(p, axis=-1, keepdims=True)
    attn = p * pl.reciprocal(denom, approx=True)      # (bn, L), EUP reciprocal

    # ---- value projection on the MXU, f32 accumulation --------------------------------
    x2 = x.reshape(bn * l, d)                         # layout-preserving when L % 8 == 0
    v = jnp.dot(x2, wvt_ref[...], preferred_element_type=jnp.float32)
    v = (v + bv_ref[...]).reshape(bn, l, d)           # (bn, L, d) f32

    # ---- attn @ v as VPU weighted sum over L (sublane reduce), not an M=1 MXU matmul --
    out = jnp.sum(attn[:, :, None] * v, axis=1)       # (bn, d) f32
    out_ref[...] = out.astype(out_ref.dtype)


def _pick_block_n(n, l, d, itemsize, vmem_budget_bytes=12 * 1024 * 1024):
    """Largest batch tile whose double-buffered x tile + f32 intermediates fit a VMEM
    budget that stays under the default scoped limit on every generation (v5e/v6e/v7x),
    and whose output block is (8,128)-legal (multiple of 8 sublanes or the full batch)."""
    per_row = l * d * (2 * itemsize + 4) + 4 * l      # 2x x (double buffer) + f32 v + score
    cap = max(1, vmem_budget_bytes // per_row)
    if cap >= n:
        return n
    for b in range(min(cap, n), 0, -1):
        if n % b == 0 and (b % 8 == 0 or b == n):
            return b
    return n                                          # fallback: single full-batch tile


def attention_layer_forward(x, wq, bq, wk, bk, wv, bv, *, block_n=None):
    """x: (N, L, d_model); weights/biases in torch.nn.Linear layout (weight = (out, in))."""
    n, l, d = x.shape
    f32 = jnp.float32

    # Fuse lin_k and lin_q into a single (1, d_model) projection, fold in 1/sqrt(d_model).
    # Fused bias (bk @ Wq^T + bq)/sqrt(d) is constant along L -> softmax-invariant -> dropped.
    w_kq = (wq.astype(f32) @ wk.astype(f32)) / jnp.sqrt(f32(d))    # (1, d)
    wv_t = wv.T.astype(x.dtype)                                    # (d, d) MXU rhs
    bv_row = bv.reshape(1, d).astype(f32)                          # (1, d)

    if block_n is None:
        block_n = _pick_block_n(n, l, d, x.dtype.itemsize)
    grid = (n // block_n,)

    # TODO(synk): return_attention_weights=True path not implemented (out-only forward).
    return pl.pallas_call(
        _attention_kernel,
        out_shape=jax.ShapeDtypeStruct((n, d), x.dtype),
        grid=grid,
        in_specs=[
            pl.BlockSpec((block_n, l, d), lambda i: (i, 0, 0)),    # x: tiled over batch
            pl.BlockSpec((1, d), lambda i: (0, 0)),                # fused scaled Wq@Wk: resident
            pl.BlockSpec((d, d), lambda i: (0, 0)),                # Wv^T: resident
            pl.BlockSpec((1, d), lambda i: (0, 0)),                # bv: resident
        ],
        out_specs=pl.BlockSpec((block_n, d), lambda i: (i, 0)),    # lane-dense (B_N, d) writes
        compiler_params=pltpu.CompilerParams(
            dimension_semantics=("parallel",)),
    )(x, w_kq, wv_t, bv_row)


def _reference_forward(x, wq, bq, wk, bk, wv, bv):
    """Pure-JAX replica of the PyTorch module, for correctness checking."""
    xf = x.astype(jnp.float32)
    k = xf @ wk.T.astype(jnp.float32) + bk
    score = k @ wq.T.astype(jnp.float32) + bq                      # (N, L, 1)
    score = jnp.swapaxes(score, 1, 2) / jnp.sqrt(jnp.float32(x.shape[-1]))
    attn = jax.nn.softmax(score, axis=-1)                          # (N, 1, L)
    v = xf @ wv.T.astype(jnp.float32) + bv
    return jnp.einsum("nol,nld->nod", attn, v)[:, 0, :]            # (N, d)


if __name__ == "__main__":
    key = jax.random.PRNGKey(0)
    n, l, d_model = 8, 16, 32
    k0, k1, k2, k3, k4, k5, k6 = jax.random.split(key, 7)

    x = jax.random.normal(k0, (n, l, d_model), dtype=jnp.float32)
    # nn.Linear-style parameters: weight (out_features, in_features), bias (out_features,)
    s = 1.0 / np.sqrt(d_model)
    wq = jax.random.uniform(k1, (1, d_model), jnp.float32, -s, s)
    bq = jax.random.uniform(k2, (1,), jnp.float32, -s, s)
    wk = jax.random.uniform(k3, (d_model, d_model), jnp.float32, -s, s)
    bk = jax.random.uniform(k4, (d_model,), jnp.float32, -s, s)
    wv = jax.random.uniform(k5, (d_model, d_model), jnp.float32, -s, s)
    bv = jax.random.uniform(k6, (d_model,), jnp.float32, -s, s)

    out = jax.block_until_ready(attention_layer_forward(x, wq, bq, wk, bk, wv, bv))
    ref = jax.block_until_ready(_reference_forward(x, wq, bq, wk, bk, wv, bv))

    err = np.max(np.abs(np.asarray(out) - np.asarray(ref)))
    if not np.allclose(np.asarray(out), np.asarray(ref), atol=2e-2, rtol=2e-2):
        raise AssertionError(f"kernel/reference mismatch: max abs err = {err}")
    print("KERNEL_OK")
</pallas_src>

<mosaic_0001>
module attributes {stable_mosaic.version = 11 : i64} {
  func.func @_attention_kernel(%arg0: i32, %arg1: memref<8x16x32xf32, #tpu.memory_space<vmem>>, %arg2: memref<1x32xf32, #tpu.memory_space<vmem>>, %arg3: memref<32x32xf32, #tpu.memory_space<vmem>>, %arg4: memref<1x32xf32, #tpu.memory_space<vmem>>, %arg5: memref<8x32xf32, #tpu.memory_space<vmem>>) attributes {dimension_semantics = [#tpu.dimension_semantics<parallel>], iteration_bounds = array<i64: 1>, scalar_prefetch = 0 : i64, scratch_operands = 0 : i64, tpu.core_type = #tpu.core_type<tc>, window_params = [{transform_indices = @transform_0, window_bounds = array<i64: 8, 16, 32>}, {pipeline_mode = #tpu.pipeline_mode<synchronous>, transform_indices = @transform_1, window_bounds = array<i64: 1, 32>}, {pipeline_mode = #tpu.pipeline_mode<synchronous>, transform_indices = @transform_2, window_bounds = array<i64: 32, 32>}, {pipeline_mode = #tpu.pipeline_mode<synchronous>, transform_indices = @transform_3, window_bounds = array<i64: 1, 32>}, {transform_indices = @transform_4, window_bounds = array<i64: 8, 32>}]} {
    %c0 = arith.constant 0 : index
    %c0_0 = arith.constant 0 : index
    %c0_1 = arith.constant 0 : index
    %0 = vector.load %arg1[%c0, %c0_0, %c0_1] : memref<8x16x32xf32, #tpu.memory_space<vmem>>, vector<8x16x32xf32>
    %c0_2 = arith.constant 0 : index
    %c0_3 = arith.constant 0 : index
    %1 = vector.load %arg2[%c0_2, %c0_3] : memref<1x32xf32, #tpu.memory_space<vmem>>, vector<1x32xf32>
    %2 = vector.shape_cast %1 : vector<1x32xf32> to vector<1x1x32xf32>
    %3 = vector.broadcast %2 : vector<1x1x32xf32> to vector<8x16x32xf32>
    %4 = arith.mulf %0, %3 : vector<8x16x32xf32>
    %cst = arith.constant dense<0.000000e+00> : vector<8x16xf32>
    %5 = vector.multi_reduction <add>, %4, %cst [2] : vector<8x16x32xf32> to vector<8x16xf32>
    %cst_4 = arith.constant dense<0xFF800000> : vector<8xf32>
    %6 = vector.multi_reduction <maximumf>, %5, %cst_4 [1] : vector<8x16xf32> to vector<8xf32>
    %7 = vector.shape_cast %6 : vector<8xf32> to vector<8x1xf32>
    %8 = vector.broadcast %7 : vector<8x1xf32> to vector<8x16xf32>
    %9 = arith.subf %5, %8 : vector<8x16xf32>
    %10 = math.exp %9 : vector<8x16xf32>
    %cst_5 = arith.constant dense<0.000000e+00> : vector<8xf32>
    %11 = vector.multi_reduction <add>, %10, %cst_5 [1] : vector<8x16xf32> to vector<8xf32>
    %12 = vector.shape_cast %11 : vector<8xf32> to vector<8x1xf32>
    %13 = tpu.reciprocal %12 {approx = true} : vector<8x1xf32> -> vector<8x1xf32>
    %14 = vector.broadcast %13 : vector<8x1xf32> to vector<8x16xf32>
    %15 = arith.mulf %10, %14 : vector<8x16xf32>
    %16 = vector.shape_cast %0 : vector<8x16x32xf32> to vector<128x32xf32>
    %c0_6 = arith.constant 0 : index
    %c0_7 = arith.constant 0 : index
    %17 = vector.load %arg3[%c0_6, %c0_7] : memref<32x32xf32, #tpu.memory_space<vmem>>, vector<32x32xf32>
    %cst_8 = arith.constant dense<0.000000e+00> : vector<128x32xf32>
    %18 = tpu.matmul %16, %17, %cst_8 {dimension_numbers = #tpu.dot_dimension_numbers<[1], [0], [0], [1], [0, 0, 1, 1], [], []>} : vector<128x32xf32>, vector<32x32xf32>, vector<128x32xf32> -> vector<128x32xf32>
    %c0_9 = arith.constant 0 : index
    %c0_10 = arith.constant 0 : index
    %19 = vector.load %arg4[%c0_9, %c0_10] : memref<1x32xf32, #tpu.memory_space<vmem>>, vector<1x32xf32>
    %20 = vector.broadcast %19 : vector<1x32xf32> to vector<128x32xf32>
    %21 = arith.addf %18, %20 : vector<128x32xf32>
    %22 = vector.shape_cast %21 : vector<128x32xf32> to vector<8x16x32xf32>
    %23 = vector.shape_cast %15 : vector<8x16xf32> to vector<8x16x1xf32>
    %24 = vector.broadcast %23 : vector<8x16x1xf32> to vector<8x16x32xf32>
    %25 = arith.mulf %24, %22 : vector<8x16x32xf32>
    %cst_11 = arith.constant dense<0.000000e+00> : vector<8x32xf32>
    %26 = vector.multi_reduction <add>, %25, %cst_11 [1] : vector<8x16x32xf32> to vector<8x32xf32>
    %c0_12 = arith.constant 0 : index
    %c0_13 = arith.constant 0 : index
    %27 = vector.load %arg5[%c0_12, %c0_13] : memref<8x32xf32, #tpu.memory_space<vmem>>, vector<8x32xf32>
    tpu.vector_store %arg5[%c0_12, %c0_13], %26 {strides = array<i32>} : memref<8x32xf32, #tpu.memory_space<vmem>>, vector<8x32xf32>,
    return
  }
  func.func @transform_0(%arg0: i32) -> (i32, i32, i32) {
    %c0_i32 = arith.constant 0 : i32
    %c0_i32_0 = arith.constant 0 : i32
    %c0_i32_1 = arith.constant 0 : i32
    return %arg0, %c0_i32, %c0_i32_0 : i32, i32, i32
  }
  func.func @transform_1(%arg0: i32) -> (i32, i32) {
    %c0_i32 = arith.constant 0 : i32
    %c0_i32_0 = arith.constant 0 : i32
    %c0_i32_1 = arith.constant 0 : i32
    return %c0_i32, %c0_i32_0 : i32, i32
  }
  func.func @transform_2(%arg0: i32) -> (i32, i32) {
    %c0_i32 = arith.constant 0 : i32
    %c0_i32_0 = arith.constant 0 : i32
    %c0_i32_1 = arith.constant 0 : i32
    return %c0_i32, %c0_i32_0 : i32, i32
  }
  func.func @transform_3(%arg0: i32) -> (i32, i32) {
    %c0_i32 = arith.constant 0 : i32
    %c0_i32_0 = arith.constant 0 : i32
    %c0_i32_1 = arith.constant 0 : i32
    return %c0_i32, %c0_i32_0 : i32, i32
  }
  func.func @transform_4(%arg0: i32) -> (i32, i32) {
    %c0_i32 = arith.constant 0 : i32
    %c0_i32_0 = arith.constant 0 : i32
    return %arg0, %c0_i32 : i32, i32
  }
}

</mosaic_0001>

<llo_original>
// kernel: tpu_custom_call.1
$region0: #{tpu_custom_call.1}
  #allocation0 [shape = 'u32[]', space=smem, size = 0x4, offset = 0x4, fixed_abs, tag = 'smem constant byte address 0x4 - core index']
  #allocation1 [shape = 'u32[144,128]{1,0:T(1,128)}', space=vmem, size = 0x12000, scoped, tag = 'internal scratch']
  %s0 = inlined_call_operand.hbm [shape: f32[8,16,32], index: 0, kind: input, shape index: {}]
  %s1 = inlined_call_operand.vmem [shape: f32[1,32], index: 1, kind: input, shape index: {}]
  %s2 = inlined_call_operand.hbm [shape: f32[32,32], index: 2, kind: input, shape index: {}]
  %s3 = inlined_call_operand.vmem [shape: f32[1,32], index: 3, kind: input, shape index: {}]
  %s4 = inlined_call_operand.hbm [shape: f32[8,32], index: 4, kind: output, shape index: {}]
  %s5 = sld [smem:[#allocation0]]
  $region34: #{tpu_custom_call.1} parent=0
    _
  %s7 = ssub.s32 1, %s5
  %s8 = scalar_select 0, %s7, %s5
  $region1: #{tpu_custom_call.1} parent=0
    #allocation2 [shape = 'u8[65536]{0}', space=vmem, size = 0x10000, scoped, tag = 'input window, operand 0, single buffered']
    #allocation3 [shape = 's32[1]{0}', space=sflag, size = 0x4, scoped, tag = 'scoped memory for tpu_custom_call.1']
    #allocation4 [shape = 's32[1]{0}', space=sflag, size = 0x4, scoped, tag = 'scoped memory for tpu_custom_call.1']
    #allocation5 [shape = 'u8[16384]{0}', space=vmem, size = 0x4000, scoped, tag = 'input window, operand 2, single buffered']
    #allocation6 [shape = 's32[1]{0}', space=sflag, size = 0x4, scoped, tag = 'scoped memory for tpu_custom_call.1']
    #allocation7 [shape = 'u8[4096]{0}', space=vmem, size = 0x1000, scoped, tag = 'output window, operand 0, single buffered']
    %9 = vsyncpa [#allocation3], 0
    %10 = vsyncpa [#allocation6], 0
    %11 = vsyncpa [#allocation4], 0
    // Predicated region
    $region2: #{tpu_custom_call.1} parent=1 // pred_check
      _
    $region3: #{tpu_custom_call.1} parent=1 // pred_check_branch
      %13 = sbr.rel (0) target = $region5
    $region4: #{tpu_custom_call.1} parent=1 // pred_region
      %s15 = ssub.s32 2048, 2048
      %16 = vsyncadd [#allocation3], %s15
      %s17 = sshll.u32 [#allocation2], 4
      %s18 = int_to_ptr.vmem [resolvable:$true] %s17
      %23 = dma.hbm_to_vmem [thread:$0]  %s0, 2048, %s18, [#allocation3], 128, 128, 8
    $region5: #{tpu_custom_call.1} parent=1 // pred_fallthru
      _
    // Predicated region
    $region6: #{tpu_custom_call.1} parent=1 // pred_check
      _
    $region7: #{tpu_custom_call.1} parent=1 // pred_check_branch
      %25 = sbr.rel (0) target = $region9
    $region8: #{tpu_custom_call.1} parent=1 // pred_region
      _
    $region9: #{tpu_custom_call.1} parent=1 // pred_fallthru
      _
    // Predicated region
    $region10: #{tpu_custom_call.1} parent=1 // pred_check
      _
    $region11: #{tpu_custom_call.1} parent=1 // pred_check_branch
      %27 = sbr.rel (0) target = $region13
    $region12: #{tpu_custom_call.1} parent=1 // pred_region
      %s29 = ssub.s32 512, 512
      %30 = vsyncadd [#allocation6], %s29
      %s31 = sshll.u32 [#allocation5], 4
      %s32 = int_to_ptr.vmem [resolvable:$true] %s31
      %37 = dma.hbm_to_vmem [thread:$0]  %s2, 512, %s32, [#allocation6], 128, 128, 8
    $region13: #{tpu_custom_call.1} parent=1 // pred_fallthru
      _
    // Predicated region
    $region14: #{tpu_custom_call.1} parent=1 // pred_check
      _
    $region15: #{tpu_custom_call.1} parent=1 // pred_check_branch
      %39 = sbr.rel (0) target = $region17
    $region16: #{tpu_custom_call.1} parent=1 // pred_region
      _
    $region17: #{tpu_custom_call.1} parent=1 // pred_fallthru
      _
    // Predicated region
    $region18: #{tpu_custom_call.1} parent=1 // pred_check
      _
    $region19: #{tpu_custom_call.1} parent=1 // pred_check_branch
      %41 = sbr.rel (0) target = $region21
    $region20: #{tpu_custom_call.1} parent=1 // pred_region
      %42 = dma.done [#allocation3], 2048
    $region21: #{tpu_custom_call.1} parent=1 // pred_fallthru
      _
    // Predicated region
    $region22: #{tpu_custom_call.1} parent=1 // pred_check
      _
    $region23: #{tpu_custom_call.1} parent=1 // pred_check_branch
      %44 = sbr.rel (0) target = $region25
    $region24: #{tpu_custom_call.1} parent=1 // pred_region
      %45 = dma.done [#allocation6], 512
    $region25: #{tpu_custom_call.1} parent=1 // pred_fallthru
      _
    %v46 = vld [vmem:[#allocation2] sm:$0xff]
    %v47 = vld [vmem:[#allocation2 + $0x8] sm:$0xff]
    %v48 = vld [vmem:[#allocation2 + $0x10] sm:$0xff]
    %v49 = vld [vmem:[#allocation2 + $0x18] sm:$0xff]
    %v50 = vld [vmem:[#allocation2 + $0x20] sm:$0xff]
    %v51 = vld [vmem:[#allocation2 + $0x28] sm:$0xff]
    %v52 = vld [vmem:[#allocation2 + $0x30] sm:$0xff]
    %v53 = vld [vmem:[#allocation2 + $0x38] sm:$0xff]
    %v54 = vld [vmem:[#allocation2 + $0x40] sm:$0xff]
    %v55 = vld [vmem:[#allocation2 + $0x48] sm:$0xff]
    %v56 = vld [vmem:[#allocation2 + $0x50] sm:$0xff]
    %v57 = vld [vmem:[#allocation2 + $0x58] sm:$0xff]
    %v58 = vld [vmem:[#allocation2 + $0x60] sm:$0xff]
    %v59 = vld [vmem:[#allocation2 + $0x68] sm:$0xff]
    %v60 = vld [vmem:[#allocation2 + $0x70] sm:$0xff]
    %v61 = vld [vmem:[#allocation2 + $0x78] sm:$0xff]
    %v62 = vld [vmem:[%s1] sm:$0x1]
    %v64 = vlaneseq
    %v65 = vshrl.u32 %v64, 7
    %v66 = vsub.s32 0, %v65
    %v67 = vrot.slane %v62, %v66
    %v69 = vmul.f32 %v46, %v67
    %v70 = vmul.f32 %v47, %v67
    %v71 = vmul.f32 %v48, %v67
    %v72 = vmul.f32 %v49, %v67
    %v73 = vmul.f32 %v50, %v67
    %v74 = vmul.f32 %v51, %v67
    %v75 = vmul.f32 %v52, %v67
    %v76 = vmul.f32 %v53, %v67
    %v77 = vmul.f32 %v54, %v67
    %v78 = vmul.f32 %v55, %v67
    %v79 = vmul.f32 %v56, %v67
    %v80 = vmul.f32 %v57, %v67
    %v81 = vmul.f32 %v58, %v67
    %v82 = vmul.f32 %v59, %v67
    %v83 = vmul.f32 %v60, %v67
    %v84 = vmul.f32 %v61, %v67
    %vm85 = vcmask 261120
    %v86 = vsel %vm85, %v69, 0.0
    %87 = vadd.xlane.f32.xlu0 %v86
    %v88 = vpop.xlane.xlu0 %87
    %v89 = vsel %vm85, %v70, 0.0
    %90 = vadd.xlane.f32.xlu0 %v89
    %v91 = vpop.xlane.xlu0 %90
    %v92 = vsel %vm85, %v71, 0.0
    %93 = vadd.xlane.f32.xlu0 %v92
    %v94 = vpop.xlane.xlu0 %93
    %v95 = vsel %vm85, %v72, 0.0
    %96 = vadd.xlane.f32.xlu0 %v95
    %v97 = vpop.xlane.xlu0 %96
    %v98 = vsel %vm85, %v73, 0.0
    %99 = vadd.xlane.f32.xlu0 %v98
    %v100 = vpop.xlane.xlu0 %99
    %v101 = vsel %vm85, %v74, 0.0
    %102 = vadd.xlane.f32.xlu0 %v101
    %v103 = vpop.xlane.xlu0 %102
    %v104 = vsel %vm85, %v75, 0.0
    %105 = vadd.xlane.f32.xlu0 %v104
    %v106 = vpop.xlane.xlu0 %105
    %v107 = vsel %vm85, %v76, 0.0
    %108 = vadd.xlane.f32.xlu0 %v107
    %v109 = vpop.xlane.xlu0 %108
    %v110 = vsel %vm85, %v77, 0.0
    %111 = vadd.xlane.f32.xlu0 %v110
    %v112 = vpop.xlane.xlu0 %111
    %v113 = vsel %vm85, %v78, 0.0
    %114 = vadd.xlane.f32.xlu0 %v113
    %v115 = vpop.xlane.xlu0 %114
    %v116 = vsel %vm85, %v79, 0.0
    %117 = vadd.xlane.f32.xlu0 %v116
    %v118 = vpop.xlane.xlu0 %117
    %v119 = vsel %vm85, %v80, 0.0
    %120 = vadd.xlane.f32.xlu0 %v119
    %v121 = vpop.xlane.xlu0 %120
    %v122 = vsel %vm85, %v81, 0.0
    %123 = vadd.xlane.f32.xlu0 %v122
    %v124 = vpop.xlane.xlu0 %123
    %v125 = vsel %vm85, %v82, 0.0
    %126 = vadd.xlane.f32.xlu0 %v125
    %v127 = vpop.xlane.xlu0 %126
    %v128 = vsel %vm85, %v83, 0.0
    %129 = vadd.xlane.f32.xlu0 %v128
    %v130 = vpop.xlane.xlu0 %129
    %v131 = vsel %vm85, %v84, 0.0
    %132 = vadd.xlane.f32.xlu0 %v131
    %v133 = vpop.xlane.xlu0 %132
    %v150 = vlaneseq
    %v151 = vand.u32 %v150, 127
    %v152 = vlaneseq
    %v153 = vshrl.u32 %v152, 7
    %v154 = vsub.s32 %v151, %v153
    %v155 = vrot.slane %v88, %v154
    %v156 = vadd.s32 %v151, 4294967288
    %v157 = vlaneseq
    %v158 = vshrl.u32 %v157, 7
    %v159 = vsub.s32 %v156, %v158
    %v160 = vrot.slane %v91, %v159
    %vm161 = vcmask 130112
    %v162 = vsel %vm161, %v160, %v155
    %v163 = vlaneseq
    %v164 = vshrl.u32 %v163, 7
    %v165 = vsub.s32 %v151, %v164
    %v166 = vrot.slane %v94, %v165
    %v167 = vlaneseq
    %v168 = vshrl.u32 %v167, 7
    %v169 = vsub.s32 %v156, %v168
    %v170 = vrot.slane %v97, %v169
    %v171 = vsel %vm161, %v170, %v166
    %v172 = vlaneseq
    %v173 = vshrl.u32 %v172, 7
    %v174 = vsub.s32 %v151, %v173
    %v175 = vrot.slane %v100, %v174
    %v176 = vlaneseq
    %v177 = vshrl.u32 %v176, 7
    %v178 = vsub.s32 %v156, %v177
    %v179 = vrot.slane %v103, %v178
    %v180 = vsel %vm161, %v179, %v175
    %v181 = vlaneseq
    %v182 = vshrl.u32 %v181, 7
    %v183 = vsub.s32 %v151, %v182
    %v184 = vrot.slane %v106, %v183
    %v185 = vlaneseq
    %v186 = vshrl.u32 %v185, 7
    %v187 = vsub.s32 %v156, %v186
    %v188 = vrot.slane %v109, %v187
    %v189 = vsel %vm161, %v188, %v184
    %v190 = vlaneseq
    %v191 = vshrl.u32 %v190, 7
    %v192 = vsub.s32 %v151, %v191
    %v193 = vrot.slane %v112, %v192
    %v194 = vlaneseq
    %v195 = vshrl.u32 %v194, 7
    %v196 = vsub.s32 %v156, %v195
    %v197 = vrot.slane %v115, %v196
    %v198 = vsel %vm161, %v197, %v193
    %v199 = vlaneseq
    %v200 = vshrl.u32 %v199, 7
    %v201 = vsub.s32 %v151, %v200
    %v202 = vrot.slane %v118, %v201
    %v203 = vlaneseq
    %v204 = vshrl.u32 %v203, 7
    %v205 = vsub.s32 %v156, %v204
    %v206 = vrot.slane %v121, %v205
    %v207 = vsel %vm161, %v206, %v202
    %v208 = vlaneseq
    %v209 = vshrl.u32 %v208, 7
    %v210 = vsub.s32 %v151, %v209
    %v211 = vrot.slane %v124, %v210
    %v212 = vlaneseq
    %v213 = vshrl.u32 %v212, 7
    %v214 = vsub.s32 %v156, %v213
    %v215 = vrot.slane %v127, %v214
    %v216 = vsel %vm161, %v215, %v211
    %v217 = vlaneseq
    %v218 = vshrl.u32 %v217, 7
    %v219 = vsub.s32 %v151, %v218
    %v220 = vrot.slane %v130, %v219
    %v221 = vlaneseq
    %v222 = vshrl.u32 %v221, 7
    %v223 = vsub.s32 %v156, %v222
    %v224 = vrot.slane %v133, %v223
    %v225 = vsel %vm161, %v224, %v220
    %vm226 = vcmask 1041409
    %v227 = vsel %vm226, %v171, %v162
    %vm228 = vcmask 1042434
    %v229 = vsel %vm228, %v180, %v227
    %vm230 = vcmask 1043459
    %v231 = vsel %vm230, %v189, %v229
    %vm232 = vcmask 1044484
    %v233 = vsel %vm232, %v198, %v231
    %vm234 = vcmask 1045509
    %v235 = vsel %vm234, %v207, %v233
    %vm236 = vcmask 1046534
    %v237 = vsel %vm236, %v216, %v235
    %vm238 = vcmask 1047559
    %v239 = vsel %vm238, %v225, %v237
    %vm241 = vcmask 130048
    %v242 = vsel %vm241, %v239, -inf
    %243 = vmax.xlane.f32.xlu0 %v242
    %v244 = vpop.xlane.xlu0 %243
    %v246 = vlaneseq
    %v247 = vshrl.u32 %v246, 7
    %v248 = vsub.s32 0, %v247
    %v249 = vrot.slane %v244, %v248
    %v250 = vlaneseq
    %v251 = vshrl.u32 %v250, 7
    %v252 = vsub.s32 1, %v251
    %v253 = vrot.slane %v244, %v252
    %v254 = vlaneseq
    %v255 = vshrl.u32 %v254, 7
    %v256 = vsub.s32 2, %v255
    %v257 = vrot.slane %v244, %v256
    %v258 = vlaneseq
    %v259 = vshrl.u32 %v258, 7
    %v260 = vsub.s32 3, %v259
    %v261 = vrot.slane %v244, %v260
    %v262 = vlaneseq
    %v263 = vshrl.u32 %v262, 7
    %v264 = vsub.s32 4, %v263
    %v265 = vrot.slane %v244, %v264
    %v266 = vlaneseq
    %v267 = vshrl.u32 %v266, 7
    %v268 = vsub.s32 5, %v267
    %v269 = vrot.slane %v244, %v268
    %v270 = vlaneseq
    %v271 = vshrl.u32 %v270, 7
    %v272 = vsub.s32 6, %v271
    %v273 = vrot.slane %v244, %v272
    %v274 = vlaneseq
    %v275 = vshrl.u32 %v274, 7
    %v276 = vsub.s32 7, %v275
    %v277 = vrot.slane %v244, %v276
    %v286 = vsub.f32 %v88, %v249
    %v287 = vsub.f32 %v91, %v249
    %v288 = vsub.f32 %v94, %v253
    %v289 = vsub.f32 %v97, %v253
    %v290 = vsub.f32 %v100, %v257
    %v291 = vsub.f32 %v103, %v257
    %v292 = vsub.f32 %v106, %v261
    %v293 = vsub.f32 %v109, %v261
    %v294 = vsub.f32 %v112, %v265
    %v295 = vsub.f32 %v115, %v265
    %v296 = vsub.f32 %v118, %v269
    %v297 = vsub.f32 %v121, %v269
    %v298 = vsub.f32 %v124, %v273
    %v299 = vsub.f32 %v127, %v273
    %v300 = vsub.f32 %v130, %v277
    %v301 = vsub.f32 %v133, %v277
    %v302 = vmul.f32 %v286, 1.442695
    %v303 = vpow.pop %v302
    %v304 = vmul.f32 %v287, 1.442695
    %v305 = vpow.pop %v304
    %v306 = vmul.f32 %v288, 1.442695
    %v307 = vpow.pop %v306
    %v308 = vmul.f32 %v289, 1.442695
    %v309 = vpow.pop %v308
    %v310 = vmul.f32 %v290, 1.442695
    %v311 = vpow.pop %v310
    %v312 = vmul.f32 %v291, 1.442695
    %v313 = vpow.pop %v312
    %v314 = vmul.f32 %v292, 1.442695
    %v315 = vpow.pop %v314
    %v316 = vmul.f32 %v293, 1.442695
    %v317 = vpow.pop %v316
    %v318 = vmul.f32 %v294, 1.442695
    %v319 = vpow.pop %v318
    %v320 = vmul.f32 %v295, 1.442695
    %v321 = vpow.pop %v320
    %v322 = vmul.f32 %v296, 1.442695
    %v323 = vpow.pop %v322
    %v324 = vmul.f32 %v297, 1.442695
    %v325 = vpow.pop %v324
    %v326 = vmul.f32 %v298, 1.442695
    %v327 = vpow.pop %v326
    %v328 = vmul.f32 %v299, 1.442695
    %v329 = vpow.pop %v328
    %v330 = vmul.f32 %v300, 1.442695
    %v331 = vpow.pop %v330
    %v332 = vmul.f32 %v301, 1.442695
    %v333 = vpow.pop %v332
    %350 = vset.pattern.permute.xlu0 0
    %351 = vperm.xlu0 %350, %v303
    %v352 = vpop.permute.xlu0 %351
    %353 = vset.pattern.permute.xlu0 0
    %354 = vperm.xlu0 %353, %v305
    %v355 = vpop.permute.xlu0 %354
    %356 = vset.pattern.permute.xlu0 0
    %357 = vperm.xlu0 %356, %v307
    %v358 = vpop.permute.xlu0 %357
    %359 = vset.pattern.permute.xlu0 0
    %360 = vperm.xlu0 %359, %v309
    %v361 = vpop.permute.xlu0 %360
    %362 = vset.pattern.permute.xlu0 0
    %363 = vperm.xlu0 %362, %v311
    %v364 = vpop.permute.xlu0 %363
    %365 = vset.pattern.permute.xlu0 0
    %366 = vperm.xlu0 %365, %v313
    %v367 = vpop.permute.xlu0 %366
    %368 = vset.pattern.permute.xlu0 0
    %369 = vperm.xlu0 %368, %v315
    %v370 = vpop.permute.xlu0 %369
    %371 = vset.pattern.permute.xlu0 0
    %372 = vperm.xlu0 %371, %v317
    %v373 = vpop.permute.xlu0 %372
    %374 = vset.pattern.permute.xlu0 0
    %375 = vperm.xlu0 %374, %v319
    %v376 = vpop.permute.xlu0 %375
    %377 = vset.pattern.permute.xlu0 0
    %378 = vperm.xlu0 %377, %v321
    %v379 = vpop.permute.xlu0 %378
    %380 = vset.pattern.permute.xlu0 0
    %381 = vperm.xlu0 %380, %v323
    %v382 = vpop.permute.xlu0 %381
    %383 = vset.pattern.permute.xlu0 0
    %384 = vperm.xlu0 %383, %v325
    %v385 = vpop.permute.xlu0 %384
    %386 = vset.pattern.permute.xlu0 0
    %387 = vperm.xlu0 %386, %v327
    %v388 = vpop.permute.xlu0 %387
    %389 = vset.pattern.permute.xlu0 0
    %390 = vperm.xlu0 %389, %v329
    %v391 = vpop.permute.xlu0 %390
    %392 = vset.pattern.permute.xlu0 0
    %393 = vperm.xlu0 %392, %v331
    %v394 = vpop.permute.xlu0 %393
    %395 = vset.pattern.permute.xlu0 0
    %396 = vperm.xlu0 %395, %v333
    %v397 = vpop.permute.xlu0 %396
    %v398 = vlaneseq
    %v399 = vshrl.u32 %v398, 7
    %v400 = vsub.s32 %v151, %v399
    %v401 = vrot.slane %v352, %v400
    %v402 = vlaneseq
    %v403 = vshrl.u32 %v402, 7
    %v404 = vsub.s32 %v156, %v403
    %v405 = vrot.slane %v355, %v404
    %v406 = vsel %vm161, %v405, %v401
    %v407 = vlaneseq
    %v408 = vshrl.u32 %v407, 7
    %v409 = vsub.s32 %v151, %v408
    %v410 = vrot.slane %v358, %v409
    %v411 = vlaneseq
    %v412 = vshrl.u32 %v411, 7
    %v413 = vsub.s32 %v156, %v412
    %v414 = vrot.slane %v361, %v413
    %v415 = vsel %vm161, %v414, %v410
    %v416 = vlaneseq
    %v417 = vshrl.u32 %v416, 7
    %v418 = vsub.s32 %v151, %v417
    %v419 = vrot.slane %v364, %v418
    %v420 = vlaneseq
    %v421 = vshrl.u32 %v420, 7
    %v422 = vsub.s32 %v156, %v421
    %v423 = vrot.slane %v367, %v422
    %v424 = vsel %vm161, %v423, %v419
    %v425 = vlaneseq
    %v426 = vshrl.u32 %v425, 7
    %v427 = vsub.s32 %v151, %v426
    %v428 = vrot.slane %v370, %v427
    %v429 = vlaneseq
    %v430 = vshrl.u32 %v429, 7
    %v431 = vsub.s32 %v156, %v430
    %v432 = vrot.slane %v373, %v431
    %v433 = vsel %vm161, %v432, %v428
    %v434 = vlaneseq
    %v435 = vshrl.u32 %v434, 7
    %v436 = vsub.s32 %v151, %v435
    %v437 = vrot.slane %v376, %v436
    %v438 = vlaneseq
    %v439 = vshrl.u32 %v438, 7
    %v440 = vsub.s32 %v156, %v439
    %v441 = vrot.slane %v379, %v440
    %v442 = vsel %vm161, %v441, %v437
    %v443 = vlaneseq
    %v444 = vshrl.u32 %v443, 7
    %v445 = vsub.s32 %v151, %v444
    %v446 = vrot.slane %v382, %v445
    %v447 = vlaneseq
    %v448 = vshrl.u32 %v447, 7
    %v449 = vsub.s32 %v156, %v448
    %v450 = vrot.slane %v385, %v449
    %v451 = vsel %vm161, %v450, %v446
    %v452 = vlaneseq
    %v453 = vshrl.u32 %v452, 7
    %v454 = vsub.s32 %v151, %v453
    %v455 = vrot.slane %v388, %v454
    %v456 = vlaneseq
    %v457 = vshrl.u32 %v456, 7
    %v458 = vsub.s32 %v156, %v457
    %v459 = vrot.slane %v391, %v458
    %v460 = vsel %vm161, %v459, %v455
    %v461 = vlaneseq
    %v462 = vshrl.u32 %v461, 7
    %v463 = vsub.s32 %v151, %v462
    %v464 = vrot.slane %v394, %v463
    %v465 = vlaneseq
    %v466 = vshrl.u32 %v465, 7
    %v467 = vsub.s32 %v156, %v466
    %v468 = vrot.slane %v397, %v467
    %v469 = vsel %vm161, %v468, %v464
    %v470 = vsel %vm226, %v415, %v406
    %v471 = vsel %vm228, %v424, %v470
    %v472 = vsel %vm230, %v433, %v471
    %v473 = vsel %vm232, %v442, %v472
    %v474 = vsel %vm234, %v451, %v473
    %v475 = vsel %vm236, %v460, %v474
    %v476 = vsel %vm238, %v469, %v475
    %v478 = vsel %vm241, %v476, 0.0
    %479 = vadd.xlane.f32.xlu0 %v478
    %v480 = vpop.xlane.xlu0 %479
    %v481 = vrcp.pop %v480
    %v483 = vlaneseq
    %v484 = vshrl.u32 %v483, 7
    %v485 = vsub.s32 0, %v484
    %v486 = vrot.slane %v481, %v485
    %v487 = vlaneseq
    %v488 = vshrl.u32 %v487, 7
    %v489 = vsub.s32 1, %v488
    %v490 = vrot.slane %v481, %v489
    %v491 = vlaneseq
    %v492 = vshrl.u32 %v491, 7
    %v493 = vsub.s32 2, %v492
    %v494 = vrot.slane %v481, %v493
    %v495 = vlaneseq
    %v496 = vshrl.u32 %v495, 7
    %v497 = vsub.s32 3, %v496
    %v498 = vrot.slane %v481, %v497
    %v499 = vlaneseq
    %v500 = vshrl.u32 %v499, 7
    %v501 = vsub.s32 4, %v500
    %v502 = vrot.slane %v481, %v501
    %v503 = vlaneseq
    %v504 = vshrl.u32 %v503, 7
    %v505 = vsub.s32 5, %v504
    %v506 = vrot.slane %v481, %v505
    %v507 = vlaneseq
    %v508 = vshrl.u32 %v507, 7
    %v509 = vsub.s32 6, %v508
    %v510 = vrot.slane %v481, %v509
    %v511 = vlaneseq
    %v512 = vshrl.u32 %v511, 7
    %v513 = vsub.s32 7, %v512
    %v514 = vrot.slane %v481, %v513
    %v523 = vmul.f32 %v303, %v486
    %v524 = vmul.f32 %v305, %v486
    %v525 = vmul.f32 %v307, %v490
    %v526 = vmul.f32 %v309, %v490
    %v527 = vmul.f32 %v311, %v494
    %v528 = vmul.f32 %v313, %v494
    %v529 = vmul.f32 %v315, %v498
    %v530 = vmul.f32 %v317, %v498
    %v531 = vmul.f32 %v319, %v502
    %v532 = vmul.f32 %v321, %v502
    %v533 = vmul.f32 %v323, %v506
    %v534 = vmul.f32 %v325, %v506
    %v535 = vmul.f32 %v327, %v510
    %v536 = vmul.f32 %v329, %v510
    %v537 = vmul.f32 %v331, %v514
    %v538 = vmul.f32 %v333, %v514
    %v539 = vld [vmem:[#allocation5] sm:$0xff]
    %v540 = vld [vmem:[#allocation5 + $0x8] sm:$0xff]
    %v541 = vld [vmem:[#allocation5 + $0x10] sm:$0xff]
    %v542 = vld [vmem:[#allocation5 + $0x18] sm:$0xff]
    %v543 = vld [vmem:[%s3] sm:$0x1]
    %v545 = vlaneseq
    %v546 = vshrl.u32 %v545, 7
    %v547 = vsub.s32 0, %v546
    %v548 = vrot.slane %v543, %v547
    %v551 = vsel %vm85, %v46, 0
    %v554 = vsel %vm85, %v47, 0
    %v557 = vsel %vm85, %v48, 0
    %v560 = vsel %vm85, %v49, 0
    %v563 = vsel %vm85, %v50, 0
    %v566 = vsel %vm85, %v51, 0
    %v569 = vsel %vm85, %v52, 0
    %v572 = vsel %vm85, %v53, 0
    %v575 = vsel %vm85, %v54, 0
    %v578 = vsel %vm85, %v55, 0
    %v581 = vsel %vm85, %v56, 0
    %v584 = vsel %vm85, %v57, 0
    %v587 = vsel %vm85, %v58, 0
    %v590 = vsel %vm85, %v59, 0
    %v593 = vsel %vm85, %v60, 0
    %v596 = vsel %vm85, %v61, 0
    %598 = vmatprep.subr.mxu0 0.0
    %599 = vmatpush1.msra.mxu0 0.0
    %600 = vmatprep.subr.mxu0 0.0
    %601 = vmatpush1.msra.mxu0 0.0
    %602 = vmatprep.subr.mxu0 0.0
    %603 = vmatpush1.msra.mxu0 0.0
    %604 = vmatprep.subr.mxu0 0.0
    %605 = vmatpush1.msra.mxu0 0.0
    %606 = vmatprep.subr.mxu0 0.0
    %607 = vmatpush1.msra.mxu0 0.0
    %608 = vmatprep.subr.mxu0 0.0
    %609 = vmatpush1.msra.mxu0 0.0
    %610 = vmatprep.subr.mxu0 0.0
    %611 = vmatpush1.msra.mxu0 0.0
    %612 = vmatprep.subr.mxu0 0.0
    %613 = vmatpush1.msra.mxu0 0.0
    %614 = vmatprep.subr.mxu0 0.0
    %615 = vmatpush1.msra.mxu0 0.0
    %616 = vmatprep.subr.mxu0 0.0
    %617 = vmatpush1.msra.mxu0 0.0
    %618 = vmatprep.subr.mxu0 0.0
    %619 = vmatpush1.msra.mxu0 0.0
    %620 = vmatprep.subr.mxu0 0.0
    %621 = vmatpush1.msra.mxu0 0.0
    %622 = vmatprep.subr.mxu0 0.0
    %623 = vmatpush1.msra.mxu0 %v542
    %624 = vmatprep.subr.mxu0 0.0
    %625 = vmatpush1.msra.mxu0 %v541
    %626 = vmatprep.subr.mxu0 0.0
    %627 = vmatpush1.msra.mxu0 %v540
    %628 = vmatprep.subr.mxu0 0.0
    %629 = vmatpush1.msra.mxu0 %v539
    %630 = vmatprep.subr.mxu0 0.0
    %631 = vmatpush2.msra.mxu0 0.0
    %632 = vmatprep.subr.mxu0 0.0
    %633 = vmatpush2.msra.mxu0 0.0
    %634 = vmatprep.subr.mxu0 0.0
    %635 = vmatpush2.msra.mxu0 0.0
    %636 = vmatprep.subr.mxu0 0.0
    %637 = vmatpush2.msra.mxu0 0.0
    %638 = vmatprep.subr.mxu0 0.0
    %639 = vmatpush2.msra.mxu0 0.0
    %640 = vmatprep.subr.mxu0 0.0
    %641 = vmatpush2.msra.mxu0 0.0
    %642 = vmatprep.subr.mxu0 0.0
    %643 = vmatpush2.msra.mxu0 0.0
    %644 = vmatprep.subr.mxu0 0.0
    %645 = vmatpush2.msra.mxu0 0.0
    %646 = vmatprep.subr.mxu0 0.0
    %647 = vmatpush2.msra.mxu0 0.0
    %648 = vmatprep.subr.mxu0 0.0
    %649 = vmatpush2.msra.mxu0 0.0
    %650 = vmatprep.subr.mxu0 0.0
    %651 = vmatpush2.msra.mxu0 0.0
    %652 = vmatprep.subr.mxu0 0.0
    %653 = vmatpush2.msra.mxu0 0.0
    %654 = vmatprep.subr.mxu0 0.0
    %655 = vmatpush2.msra.mxu0 0.0
    %656 = vmatprep.subr.mxu0 0.0
    %657 = vmatpush2.msra.mxu0 0.0
    %658 = vmatprep.subr.mxu0 0.0
    %659 = vmatpush2.msra.mxu0 0.0
    %660 = vmatprep.subr.mxu0 0.0
    %661 = vmatpush2.msra.mxu0 0.0
    %662 = vmatprep.mubr.f32.mxu0 0.0
    %663 = vmatmul.mubr.f32.gmra.mxu0 %v551
    %v664 = vpop.f32.mrf.mxu0
    %v665 = vadd.f32 %v548, %v664
    %v666 = vpop.f32.mrf.mxu0
    %667 = vmatprep.mubr.f32.mxu0 0.0
    %668 = vmatmul.mubr.f32.gmra.mxu0 %v554
    %v669 = vpop.f32.mrf.mxu0
    %v670 = vadd.f32 %v548, %v669
    %v671 = vpop.f32.mrf.mxu0
    %672 = vmatprep.mubr.f32.mxu0 0.0
    %673 = vmatmul.mubr.f32.gmra.mxu0 %v557
    %v674 = vpop.f32.mrf.mxu0
    %v675 = vadd.f32 %v548, %v674
    %v676 = vpop.f32.mrf.mxu0
    %677 = vmatprep.mubr.f32.mxu0 0.0
    %678 = vmatmul.mubr.f32.gmra.mxu0 %v560
    %v679 = vpop.f32.mrf.mxu0
    %v680 = vadd.f32 %v548, %v679
    %v681 = vpop.f32.mrf.mxu0
    %682 = vmatprep.mubr.f32.mxu0 0.0
    %683 = vmatmul.mubr.f32.gmra.mxu0 %v563
    %v684 = vpop.f32.mrf.mxu0
    %v685 = vadd.f32 %v548, %v684
    %v686 = vpop.f32.mrf.mxu0
    %687 = vmatprep.mubr.f32.mxu0 0.0
    %688 = vmatmul.mubr.f32.gmra.mxu0 %v566
    %v689 = vpop.f32.mrf.mxu0
    %v690 = vadd.f32 %v548, %v689
    %v691 = vpop.f32.mrf.mxu0
    %692 = vmatprep.mubr.f32.mxu0 0.0
    %693 = vmatmul.mubr.f32.gmra.mxu0 %v569
    %v694 = vpop.f32.mrf.mxu0
    %v695 = vadd.f32 %v548, %v694
    %v696 = vpop.f32.mrf.mxu0
    %697 = vmatprep.mubr.f32.mxu0 0.0
    %698 = vmatmul.mubr.f32.gmra.mxu0 %v572
    %v699 = vpop.f32.mrf.mxu0
    %v700 = vadd.f32 %v548, %v699
    %v701 = vpop.f32.mrf.mxu0
    %702 = vmatprep.mubr.f32.mxu0 0.0
    %703 = vmatmul.mubr.f32.gmra.mxu0 %v575
    %v704 = vpop.f32.mrf.mxu0
    %v705 = vadd.f32 %v548, %v704
    %v706 = vpop.f32.mrf.mxu0
    %707 = vmatprep.mubr.f32.mxu0 0.0
    %708 = vmatmul.mubr.f32.gmra.mxu0 %v578
    %v709 = vpop.f32.mrf.mxu0
    %v710 = vadd.f32 %v548, %v709
    %v711 = vpop.f32.mrf.mxu0
    %712 = vmatprep.mubr.f32.mxu0 0.0
    %713 = vmatmul.mubr.f32.gmra.mxu0 %v581
    %v714 = vpop.f32.mrf.mxu0
    %v715 = vadd.f32 %v548, %v714
    %v716 = vpop.f32.mrf.mxu0
    %717 = vmatprep.mubr.f32.mxu0 0.0
    %718 = vmatmul.mubr.f32.gmra.mxu0 %v584
    %v719 = vpop.f32.mrf.mxu0
    %v720 = vadd.f32 %v548, %v719
    %v721 = vpop.f32.mrf.mxu0
    %722 = vmatprep.mubr.f32.mxu0 0.0
    %723 = vmatmul.mubr.f32.gmra.mxu0 %v587
    %v724 = vpop.f32.mrf.mxu0
    %v725 = vadd.f32 %v548, %v724
    %v726 = vpop.f32.mrf.mxu0
    %727 = vmatprep.mubr.f32.mxu0 0.0
    %728 = vmatmul.mubr.f32.gmra.mxu0 %v590
    %v729 = vpop.f32.mrf.mxu0
    %v730 = vadd.f32 %v548, %v729
    %v731 = vpop.f32.mrf.mxu0
    %732 = vmatprep.mubr.f32.mxu0 0.0
    %733 = vmatmul.mubr.f32.gmra.mxu0 %v593
    %v734 = vpop.f32.mrf.mxu0
    %v735 = vadd.f32 %v548, %v734
    %v736 = vpop.f32.mrf.mxu0
    %737 = vmatprep.mubr.f32.mxu0 0.0
    %738 = vmatmul.mubr.f32.gmra.mxu0 %v596
    %v739 = vpop.f32.mrf.mxu0
    %v740 = vadd.f32 %v548, %v739
    %v741 = vpop.f32.mrf.mxu0
    %742 = vdwg.mxu0
    %744 = vset.pattern.permute.xlu0 0
    %745 = vperm.xlu0 %744, %v523
    %v746 = vpop.permute.xlu0 %745
    %749 = vset.pattern.permute.xlu0 0
    %750 = vperm.xlu0 %749, %v524
    %v751 = vpop.permute.xlu0 %750
    %754 = vset.pattern.permute.xlu0 0
    %755 = vperm.xlu0 %754, %v525
    %v756 = vpop.permute.xlu0 %755
    %759 = vset.pattern.permute.xlu0 0
    %760 = vperm.xlu0 %759, %v526
    %v761 = vpop.permute.xlu0 %760
    %764 = vset.pattern.permute.xlu0 0
    %765 = vperm.xlu0 %764, %v527
    %v766 = vpop.permute.xlu0 %765
    %769 = vset.pattern.permute.xlu0 0
    %770 = vperm.xlu0 %769, %v528
    %v771 = vpop.permute.xlu0 %770
    %774 = vset.pattern.permute.xlu0 0
    %775 = vperm.xlu0 %774, %v529
    %v776 = vpop.permute.xlu0 %775
    %779 = vset.pattern.permute.xlu0 0
    %780 = vperm.xlu0 %779, %v530
    %v781 = vpop.permute.xlu0 %780
    %784 = vset.pattern.permute.xlu0 0
    %785 = vperm.xlu0 %784, %v531
    %v786 = vpop.permute.xlu0 %785
    %789 = vset.pattern.permute.xlu0 0
    %790 = vperm.xlu0 %789, %v532
    %v791 = vpop.permute.xlu0 %790
    %794 = vset.pattern.permute.xlu0 0
    %795 = vperm.xlu0 %794, %v533
    %v796 = vpop.permute.xlu0 %795
    %799 = vset.pattern.permute.xlu0 0
    %800 = vperm.xlu0 %799, %v534
    %v801 = vpop.permute.xlu0 %800
    %804 = vset.pattern.permute.xlu0 0
    %805 = vperm.xlu0 %804, %v535
    %v806 = vpop.permute.xlu0 %805
    %809 = vset.pattern.permute.xlu0 0
    %810 = vperm.xlu0 %809, %v536
    %v811 = vpop.permute.xlu0 %810
    %814 = vset.pattern.permute.xlu0 0
    %815 = vperm.xlu0 %814, %v537
    %v816 = vpop.permute.xlu0 %815
    %819 = vset.pattern.permute.xlu0 0
    %820 = vperm.xlu0 %819, %v538
    %v821 = vpop.permute.xlu0 %820
    %v823 = vmul.f32 %v746, %v665
    %v824 = vmul.f32 %v751, %v670
    %v825 = vmul.f32 %v756, %v675
    %v826 = vmul.f32 %v761, %v680
    %v827 = vmul.f32 %v766, %v685
    %v828 = vmul.f32 %v771, %v690
    %v829 = vmul.f32 %v776, %v695
    %v830 = vmul.f32 %v781, %v700
    %v831 = vmul.f32 %v786, %v705
    %v832 = vmul.f32 %v791, %v710
    %v833 = vmul.f32 %v796, %v715
    %v834 = vmul.f32 %v801, %v720
    %v835 = vmul.f32 %v806, %v725
    %v836 = vmul.f32 %v811, %v730
    %v837 = vmul.f32 %v816, %v735
    %v838 = vmul.f32 %v821, %v740
    %v839 = vsel %vm85, %v823, 0.0
    %v840 = vsel %vm85, %v824, 0.0
    %v841 = vadd.f32 %v839, %v840
    %v842 = vrot.slane %v841, 4
    %v843 = vadd.f32 %v841, %v842
    %v844 = vrot.slane %v843, 2
    %v845 = vadd.f32 %v843, %v844
    %v846 = vrot.slane %v845, 1
    %v847 = vadd.f32 %v845, %v846
    %v848 = vsel %vm85, %v825, 0.0
    %v849 = vsel %vm85, %v826, 0.0
    %v850 = vadd.f32 %v848, %v849
    %v851 = vrot.slane %v850, 4
    %v852 = vadd.f32 %v850, %v851
    %v853 = vrot.slane %v852, 2
    %v854 = vadd.f32 %v852, %v853
    %v855 = vrot.slane %v854, 1
    %v856 = vadd.f32 %v854, %v855
    %v857 = vsel %vm85, %v827, 0.0
    %v858 = vsel %vm85, %v828, 0.0
    %v859 = vadd.f32 %v857, %v858
    %v860 = vrot.slane %v859, 4
    %v861 = vadd.f32 %v859, %v860
    %v862 = vrot.slane %v861, 2
    %v863 = vadd.f32 %v861, %v862
    %v864 = vrot.slane %v863, 1
    %v865 = vadd.f32 %v863, %v864
    %v866 = vsel %vm85, %v829, 0.0
    %v867 = vsel %vm85, %v830, 0.0
    %v868 = vadd.f32 %v866, %v867
    %v869 = vrot.slane %v868, 4
    %v870 = vadd.f32 %v868, %v869
    %v871 = vrot.slane %v870, 2
    %v872 = vadd.f32 %v870, %v871
    %v873 = vrot.slane %v872, 1
    %v874 = vadd.f32 %v872, %v873
    %v875 = vsel %vm85, %v831, 0.0
    %v876 = vsel %vm85, %v832, 0.0
    %v877 = vadd.f32 %v875, %v876
    %v878 = vrot.slane %v877, 4
    %v879 = vadd.f32 %v877, %v878
    %v880 = vrot.slane %v879, 2
    %v881 = vadd.f32 %v879, %v880
    %v882 = vrot.slane %v881, 1
    %v883 = vadd.f32 %v881, %v882
    %v884 = vsel %vm85, %v833, 0.0
    %v885 = vsel %vm85, %v834, 0.0
    %v886 = vadd.f32 %v884, %v885
    %v887 = vrot.slane %v886, 4
    %v888 = vadd.f32 %v886, %v887
    %v889 = vrot.slane %v888, 2
    %v890 = vadd.f32 %v888, %v889
    %v891 = vrot.slane %v890, 1
    %v892 = vadd.f32 %v890, %v891
    %v893 = vsel %vm85, %v835, 0.0
    %v894 = vsel %vm85, %v836, 0.0
    %v895 = vadd.f32 %v893, %v894
    %v896 = vrot.slane %v895, 4
    %v897 = vadd.f32 %v895, %v896
    %v898 = vrot.slane %v897, 2
    %v899 = vadd.f32 %v897, %v898
    %v900 = vrot.slane %v899, 1
    %v901 = vadd.f32 %v899, %v900
    %v902 = vsel %vm85, %v837, 0.0
    %v903 = vsel %vm85, %v838, 0.0
    %v904 = vadd.f32 %v902, %v903
    %v905 = vrot.slane %v904, 4
    %v906 = vadd.f32 %v904, %v905
    %v907 = vrot.slane %v906, 2
    %v908 = vadd.f32 %v906, %v907
    %v909 = vrot.slane %v908, 1
    %v910 = vadd.f32 %v908, %v909
    %v919 = vsel %vm226, %v856, %v847
    %v920 = vsel %vm228, %v865, %v919
    %v921 = vsel %vm230, %v874, %v920
    %v922 = vsel %vm232, %v883, %v921
    %v923 = vsel %vm234, %v892, %v922
    %v924 = vsel %vm236, %v901, %v923
    %v925 = vsel %vm238, %v910, %v924
    %927 = vst.msk [vmem:[#allocation7] sm:$0xff] %vm85, %v925
    // Predicated region
    $region26: #{tpu_custom_call.1} parent=1 // pred_check
      _
    $region27: #{tpu_custom_call.1} parent=1 // pred_check_branch
      %929 = sbr.rel (0) target = $region29
    $region28: #{tpu_custom_call.1} parent=1 // pred_region
      %s931 = ssub.s32 128, 128
      %932 = vsyncadd [#allocation4], %s931
      %s934 = sshll.u32 [#allocation7], 4
      %s935 = int_to_ptr.vmem [resolvable:$true] %s934
      %937 = dma.vmem_to_hbm [thread:$0]  %s935, 128, %s4, [#allocation4]
    $region29: #{tpu_custom_call.1} parent=1 // pred_fallthru
      _
    // Predicated region
    $region30: #{tpu_custom_call.1} parent=1 // pred_check
      _
    $region31: #{tpu_custom_call.1} parent=1 // pred_check_branch
      %939 = sbr.rel (0) target = $region33
    $region32: #{tpu_custom_call.1} parent=1 // pred_region
      %940 = dma.done [#allocation4], 128
    $region33: #{tpu_custom_call.1} parent=1 // pred_fallthru
      _
    %941 = vsyncpa [#allocation3], 1
    %942 = vsyncpa [#allocation6], 1
    %943 = vsyncpa [#allocation4], 1

</llo_original>
